<compile_context>
chip_gen: v7x
topology: tpu7x:2x2x1
jax: 0.10.0
libtpu: 0.0.40
codegen_flags: <defaults>
</compile_context>

<pallas_src>
import jax
import jax.numpy as jnp
from jax.experimental import pallas as pl
from jax.experimental.pallas import tpu as pltpu


def _copy_kernel(x_ref, o_ref):
    # Straight identity copy of the current tile: pure vld/vst, DMA-bound.
    o_ref[...] = x_ref[...]


def _resolve_shape(shape, total):
    """torch.Tensor.view(*shape) semantics: resolve a single -1."""
    shape = list(shape)
    if shape.count(-1) > 1:
        raise ValueError("only one dimension can be inferred")
    if -1 in shape:
        known = 1
        for s in shape:
            if s != -1:
                known *= s
        shape[shape.index(-1)] = total // known
    prod = 1
    for s in shape:
        prod *= s
    if prod != total:
        raise ValueError("shape is invalid for input size")
    return tuple(shape)


def _pallas_copy_view(x, out_shape):
    """Explicit-copy view: lane-dense streaming identity copy kernel."""
    n = x.size
    itemsize = jnp.dtype(x.dtype).itemsize
    sublane = {4: 8, 2: 16, 1: 32}.get(itemsize, 8)

    # Widest lane-dense column count (multiple of 128) dividing n exactly:
    # long unmasked vst runs + contiguous DMA bursts, no wrapper padding.
    cols = 0
    for c in (32768, 16384, 8192, 4096, 2048, 1024, 512, 256, 128):
        if n % c == 0:
            cols = c
            break

    if n == 0 or cols == 0:
        # Ragged (not 128-aligned) or empty: metadata-only reshape.
        return jnp.reshape(x, out_shape)

    rows = n // cols
    slab = x.reshape(rows, cols)  # metadata-only reshape of contiguous data

    # ~4 MiB tiles, sublane-aligned.  Double-buffered in + out = ~16 MiB,
    # within the 48 MiB scoped-VMEM limit requested below on every generation
    # (v5e default is only 16 MiB, v7x physical is 64 MiB).
    target_rows = max(sublane, (4 * 1024 * 1024) // (cols * itemsize))
    if rows <= sublane:
        tile_rows = rows
    else:
        tile_rows = min(rows, target_rows)
        tile_rows = max(sublane, (tile_rows // sublane) * sublane)
        # Prefer >= 4 grid steps when the array allows it, so the "parallel"
        # grid axis gives both v7x TensorCores work.
        min_steps = 4
        if pl.cdiv(rows, tile_rows) < min_steps and rows > min_steps * sublane:
            tile_rows = max(
                sublane,
                (((rows + min_steps - 1) // min_steps) // sublane) * sublane,
            )
    grid = (pl.cdiv(rows, tile_rows),)

    out_slab = pl.pallas_call(
        _copy_kernel,
        out_shape=jax.ShapeDtypeStruct((rows, cols), x.dtype),
        grid_spec=pltpu.PrefetchScalarGridSpec(
            num_scalar_prefetch=0,
            grid=grid,
            in_specs=[pl.BlockSpec((tile_rows, cols), lambda i: (i, 0))],
            out_specs=pl.BlockSpec((tile_rows, cols), lambda i: (i, 0)),
        ),
        compiler_params=pltpu.CompilerParams(
            dimension_semantics=("parallel",),
            vmem_limit_bytes=48 * 1024 * 1024,
        ),
        cost_estimate=pl.CostEstimate(
            flops=0, transcendentals=0, bytes_accessed=2 * n * itemsize),
    )(slab)

    return out_slab.reshape(out_shape)


def pallas_view(x, shape, force_copy=False):
    """Equivalent of torch.Tensor.view(*shape) for a contiguous input.

    Default: metadata-only (free).  force_copy=True materializes the result
    through the Pallas streaming-copy kernel.
    """
    out_shape = _resolve_shape(shape, x.size)
    if not force_copy:
        # A contiguous view is pure metadata; this beats any kernel.
        return jnp.reshape(x, out_shape)
    return _pallas_copy_view(x, out_shape)


class View:
    """JAX/Pallas counterpart of the PyTorch View module."""

    def __init__(self, shape, force_copy=False):
        self.shape = tuple(shape) if isinstance(shape, (tuple, list)) else (shape,)
        self.force_copy = force_copy

    def __call__(self, x):
        return pallas_view(x, self.shape, force_copy=self.force_copy)


if __name__ == "__main__":
    key = jax.random.PRNGKey(0)

    # Primary test (matches the PyTorch module's usage): default metadata path.
    x = jax.random.normal(key, (2, 4, 16, 16), dtype=jnp.float32)
    ref = x.reshape(2, -1)
    y = View((2, -1))(x)
    jax.block_until_ready(y)
    assert y.shape == ref.shape and y.dtype == ref.dtype
    assert bool(jnp.all(y == ref))

    # Same input through the explicit Pallas copy kernel (kernel runs on TPU).
    y_copy = View((2, -1), force_copy=True)(x)
    jax.block_until_ready(y_copy)
    assert y_copy.shape == ref.shape and y_copy.dtype == ref.dtype
    assert bool(jnp.all(y_copy == ref))

    # Secondary: sub-32-bit dtype, flatten-all view, Pallas copy path.
    x2 = jax.random.normal(key, (4, 16, 128), dtype=jnp.bfloat16)
    y2 = View((-1,), force_copy=True)(x2)
    jax.block_until_ready(y2)
    assert bool(jnp.all(y2 == x2.reshape(-1)))

    # Secondary: ragged element count -> metadata-only fallback path.
    x3 = jax.random.normal(key, (3, 5, 7), dtype=jnp.float32)
    y3 = View((5, 21))(x3)
    jax.block_until_ready(y3)
    assert bool(jnp.all(y3 == x3.reshape(5, 21)))

    print("KERNEL_OK")
</pallas_src>

<mosaic_0001>
module attributes {stable_mosaic.version = 11 : i64} {
  func.func @_copy_kernel(%arg0: i32, %arg1: memref<1x2048xf32, #tpu.memory_space<vmem>>, %arg2: memref<1x2048xf32, #tpu.memory_space<vmem>>) attributes {dimension_semantics = [#tpu.dimension_semantics<parallel>], iteration_bounds = array<i64: 1>, scalar_prefetch = 0 : i64, scratch_operands = 0 : i64, tpu.core_type = #tpu.core_type<tc>, window_params = [{transform_indices = @transform_0, window_bounds = array<i64: 1, 2048>}, {transform_indices = @transform_1, window_bounds = array<i64: 1, 2048>}]} {
    %c0 = arith.constant 0 : index
    %c0_0 = arith.constant 0 : index
    %0 = vector.load %arg1[%c0, %c0_0] : memref<1x2048xf32, #tpu.memory_space<vmem>>, vector<1x2048xf32>
    %c0_1 = arith.constant 0 : index
    %c0_2 = arith.constant 0 : index
    %1 = vector.load %arg2[%c0_1, %c0_2] : memref<1x2048xf32, #tpu.memory_space<vmem>>, vector<1x2048xf32>
    tpu.vector_store %arg2[%c0_1, %c0_2], %0 {strides = array<i32>} : memref<1x2048xf32, #tpu.memory_space<vmem>>, vector<1x2048xf32>,
    return
  }
  func.func @transform_0(%arg0: i32) -> (i32, i32) {
    %c0_i32 = arith.constant 0 : i32
    %c0_i32_0 = arith.constant 0 : i32
    return %arg0, %c0_i32 : i32, i32
  }
  func.func @transform_1(%arg0: i32) -> (i32, i32) {
    %c0_i32 = arith.constant 0 : i32
    %c0_i32_0 = arith.constant 0 : i32
    return %arg0, %c0_i32 : i32, i32
  }
}

</mosaic_0001>

<llo_original>
// kernel: tpu_custom_call.1
$region0: #{tpu_custom_call.1}
  #allocation0 [shape = 'u32[]', space=smem, size = 0x4, offset = 0x4, fixed_abs, tag = 'smem constant byte address 0x4 - core index']
  #allocation1 [shape = 'u32[144,128]{1,0:T(1,128)}', space=vmem, size = 0x12000, scoped, tag = 'internal scratch']
  %s0 = inlined_call_operand.hbm [shape: f32[1,2048], index: 0, kind: input, shape index: {}]
  %s1 = inlined_call_operand.hbm [shape: f32[1,2048], index: 1, kind: output, shape index: {}]
  %s2 = sld [smem:[#allocation0]]
  $region18: #{tpu_custom_call.1} parent=0
    _
  %s4 = ssub.s32 1, %s2
  %s5 = scalar_select 0, %s4, %s2
  $region1: #{tpu_custom_call.1} parent=0
    #allocation2 [shape = 'u8[8192]{0}', space=vmem, size = 0x2000, scoped, tag = 'input window, operand 0, single buffered']
    #allocation3 [shape = 's32[1]{0}', space=sflag, size = 0x4, scoped, tag = 'scoped memory for tpu_custom_call.1']
    #allocation4 [shape = 's32[1]{0}', space=sflag, size = 0x4, scoped, tag = 'scoped memory for tpu_custom_call.1']
    #allocation5 [shape = 'u8[8192]{0}', space=vmem, size = 0x2000, scoped, tag = 'output window, operand 0, single buffered']
    %6 = vsyncpa [#allocation3], 0
    %7 = vsyncpa [#allocation4], 0
    // Predicated region
    $region2: #{tpu_custom_call.1} parent=1 // pred_check
      _
    $region3: #{tpu_custom_call.1} parent=1 // pred_check_branch
      %9 = sbr.rel (0) target = $region5
    $region4: #{tpu_custom_call.1} parent=1 // pred_region
      %s11 = ssub.s32 256, 256
      %12 = vsyncadd [#allocation3], %s11
      %s14 = sshll.u32 [#allocation2], 4
      %s15 = int_to_ptr.vmem [resolvable:$true] %s14
      %17 = dma.hbm_to_vmem [thread:$0]  %s0, 256, %s15, [#allocation3]
    $region5: #{tpu_custom_call.1} parent=1 // pred_fallthru
      _
    // Predicated region
    $region6: #{tpu_custom_call.1} parent=1 // pred_check
      _
    $region7: #{tpu_custom_call.1} parent=1 // pred_check_branch
      %19 = sbr.rel (0) target = $region9
    $region8: #{tpu_custom_call.1} parent=1 // pred_region
      %20 = dma.done [#allocation3], 256
    $region9: #{tpu_custom_call.1} parent=1 // pred_fallthru
      _
    %v21 = vld [vmem:[#allocation2] sm:$0xff]
    %v22 = vld [vmem:[#allocation2 + $0x8] sm:$0xff]
    %23 = vst [vmem:[#allocation5] sm:$0xff] %v21
    %24 = vst [vmem:[#allocation5 + $0x8] sm:$0xff] %v22
    // Predicated region
    $region10: #{tpu_custom_call.1} parent=1 // pred_check
      _
    $region11: #{tpu_custom_call.1} parent=1 // pred_check_branch
      %26 = sbr.rel (0) target = $region13
    $region12: #{tpu_custom_call.1} parent=1 // pred_region
      %s28 = ssub.s32 256, 256
      %29 = vsyncadd [#allocation4], %s28
      %s31 = sshll.u32 [#allocation5], 4
      %s32 = int_to_ptr.vmem [resolvable:$true] %s31
      %34 = dma.vmem_to_hbm [thread:$0]  %s32, 256, %s1, [#allocation4]
    $region13: #{tpu_custom_call.1} parent=1 // pred_fallthru
      _
    // Predicated region
    $region14: #{tpu_custom_call.1} parent=1 // pred_check
      _
    $region15: #{tpu_custom_call.1} parent=1 // pred_check_branch
      %36 = sbr.rel (0) target = $region17
    $region16: #{tpu_custom_call.1} parent=1 // pred_region
      %37 = dma.done [#allocation4], 256
    $region17: #{tpu_custom_call.1} parent=1 // pred_fallthru
      _
    %38 = vsyncpa [#allocation3], 1
    %39 = vsyncpa [#allocation4], 1

</llo_original>
